<compile_context>
chip_gen: v7x
topology: tpu7x:2x2x1
jax: 0.10.0
libtpu: 0.0.40
codegen_flags: <defaults>
</compile_context>

<pallas_src>
import functools

import jax
import jax.numpy as jnp
from jax.experimental import pallas as pl
from jax.experimental.pallas import tpu as pltpu


def _round_up(n: int, m: int) -> int:
    return ((n + m - 1) // m) * m


def sequential_mlp_kernel(x_ref, w1_ref, b1_ref, w2_ref, b2_ref, o_ref):
    # Module 0: Linear(d_in -> d_hid).  Cast activations to the weight dtype
    # in-kernel (VPU), accumulate in f32 on the MXU.
    x = x_ref[...].astype(w1_ref.dtype)
    h = jnp.dot(x, w1_ref[...], preferred_element_type=jnp.float32)
    h = h + b1_ref[...]                      # f32 epilogue (bias broadcast)
    # Module 1: ReLU (f32 on the VPU -- required on v5e, fine everywhere).
    h = jnp.maximum(h, 0.0)
    # Module 2: Linear(d_hid -> d_out).  bf16 operands, f32 accumulation.
    y = jnp.dot(h.astype(w2_ref.dtype), w2_ref[...],
                preferred_element_type=jnp.float32)
    y = y + b2_ref[...]
    o_ref[...] = y.astype(o_ref.dtype)


@functools.partial(jax.jit, static_argnames=("batch_tile",))
def sequential_forward(x, w1, b1, w2, b2, *, batch_tile=2048):
    """Fused Sequential(Linear, ReLU, Linear) forward.

    x  : [B, d_in]   activations (f32, unpadded -- streamed as-is)
    w1 : [d_in, d_hid]  (bf16, prepared once via prepare_params)
    b1 : [1, d_hid]     (f32)
    w2 : [d_hid, d_out] (bf16)
    b2 : [1, d_out]     (f32)
    Returns [B, d_out] in x.dtype.
    """
    B, d_in = x.shape
    d_hid = w1.shape[1]
    d_out = w2.shape[1]
    out_dtype = x.dtype

    # --- batch tiling --------------------------------------------------------
    # 16-row alignment (bf16 packs 16 rows per sublane group); at least two
    # grid steps when B allows so both v7x TensorCores get work.
    tb_align = 16 if w1.dtype == jnp.bfloat16 else 8
    max_tb = min(batch_tile, _round_up(B, tb_align))
    if B >= 2 * tb_align:
        tb = min(max_tb, _round_up(pl.cdiv(B, 2), tb_align))
    else:
        tb = max_tb
    grid_b = pl.cdiv(B, tb)
    b_pad = grid_b * tb

    # Pad only the batch dim, only when needed (no feature padding, no cast).
    x_in = x if b_pad == B else jnp.pad(x, ((0, b_pad - B), (0, 0)))

    # --- VMEM budget (tiny now): buffered x/out tiles + resident weights -----
    x_tile_bytes = tb * d_in * x.dtype.itemsize
    o_tile_bytes = tb * d_out * jnp.dtype(out_dtype).itemsize
    h_tile_bytes = tb * d_hid * (4 + 2)           # f32 intermediate + bf16 copy
    weight_bytes = (w1.size * w1.dtype.itemsize + w2.size * w2.dtype.itemsize
                    + b1.size * b1.dtype.itemsize + b2.size * b2.dtype.itemsize)
    vmem_limit = int(min(32 << 20,                # well under v7x's 64 MiB
                         3 * x_tile_bytes + 2 * o_tile_bytes + h_tile_bytes
                         + weight_bytes + (4 << 20)))

    flops = 2 * b_pad * (d_in * d_hid + d_hid * d_out)
    bytes_accessed = (x_in.size * x_in.dtype.itemsize + weight_bytes
                      + b_pad * d_out * jnp.dtype(out_dtype).itemsize)

    vmem = pltpu.MemorySpace.VMEM
    # Deeper x buffering only pays off when there are enough grid steps.
    x_pipeline = pl.Buffered(3) if grid_b >= 3 else pl.Buffered(2)

    out_padded = pl.pallas_call(
        sequential_mlp_kernel,
        out_shape=jax.ShapeDtypeStruct((b_pad, d_out), out_dtype),
        grid=(grid_b,),
        in_specs=[
            # x streams over the batch grid, unpadded, f32.
            pl.BlockSpec((tb, d_in), lambda i: (i, 0), memory_space=vmem,
                         pipeline_mode=x_pipeline),
            # Weights / biases pinned: same block every step -> VMEM-resident.
            pl.BlockSpec((d_in, d_hid), lambda i: (0, 0), memory_space=vmem),
            pl.BlockSpec((1, d_hid), lambda i: (0, 0), memory_space=vmem),
            pl.BlockSpec((d_hid, d_out), lambda i: (0, 0), memory_space=vmem),
            pl.BlockSpec((1, d_out), lambda i: (0, 0), memory_space=vmem),
        ],
        out_specs=pl.BlockSpec((tb, d_out), lambda i: (i, 0),
                               memory_space=vmem),
        compiler_params=pltpu.CompilerParams(
            dimension_semantics=("parallel",),
            vmem_limit_bytes=vmem_limit,
        ),
        cost_estimate=pl.CostEstimate(
            flops=int(flops), transcendentals=0,
            bytes_accessed=int(bytes_accessed)),
    )(x_in, w1, b1, w2, b2)

    return out_padded if b_pad == B else out_padded[:B]


def init_params(key, d_in, d_hidden, d_out, dtype=jnp.float32):
    """Deterministic init mimicking torch.nn.Linear default U(-1/sqrt(fan_in), +)."""
    k1, k2, k3, k4 = jax.random.split(key, 4)
    lim1 = 1.0 / jnp.sqrt(d_in)
    lim2 = 1.0 / jnp.sqrt(d_hidden)
    w1 = jax.random.uniform(k1, (d_in, d_hidden), dtype, -lim1, lim1)
    b1 = jax.random.uniform(k2, (1, d_hidden), dtype, -lim1, lim1)
    w2 = jax.random.uniform(k3, (d_hidden, d_out), dtype, -lim2, lim2)
    b2 = jax.random.uniform(k4, (1, d_out), dtype, -lim2, lim2)
    return w1, b1, w2, b2


def prepare_params(w1, b1, w2, b2, matmul_dtype=jnp.bfloat16):
    """One-time (hoisted) weight preparation: cast matmul operands, keep f32 biases."""
    return (w1.astype(matmul_dtype), b1.astype(jnp.float32),
            w2.astype(matmul_dtype), b2.astype(jnp.float32))


if __name__ == "__main__":
    # TODO(synk): beacon.Module's compile/fit/evaluate/save/load (loss,
    # optimiser, data loaders, torch.save) are host-side training machinery
    # with no kernel equivalent; only Sequential.forward is implemented here.
    B, D_IN, D_HID, D_OUT = 8, 32, 64, 16

    key = jax.random.PRNGKey(0)
    kx, kp = jax.random.split(key)
    x = jax.random.normal(kx, (B, D_IN), jnp.float32)
    w1, b1, w2, b2 = init_params(kp, D_IN, D_HID, D_OUT)
    w1p, b1p, w2p, b2p = prepare_params(w1, b1, w2, b2)   # hoisted, done once

    out = sequential_forward(x, w1p, b1p, w2p, b2p)
    out = jax.block_until_ready(out)
    assert out.shape == (B, D_OUT)

    # Reference with the same bf16-operand / f32-accumulate arithmetic.
    bf = jnp.bfloat16
    h_ref = jnp.dot(x.astype(bf), w1.astype(bf),
                    preferred_element_type=jnp.float32) + b1
    h_ref = jnp.maximum(h_ref, 0.0)
    ref = jnp.dot(h_ref.astype(bf), w2.astype(bf),
                  preferred_element_type=jnp.float32) + b2
    assert jnp.allclose(out, ref, atol=1e-3, rtol=1e-3)

    # Loose check against the pure-f32 forward (bf16 operand rounding only).
    ref_f32 = jnp.maximum(x @ w1 + b1, 0.0) @ w2 + b2
    assert jnp.allclose(out, ref_f32, atol=5e-2, rtol=5e-2)

    print("KERNEL_OK")
</pallas_src>

<mosaic_0001>
module attributes {stable_mosaic.version = 11 : i64} {
  func.func @sequential_mlp_kernel(%arg0: i32, %arg1: memref<16x32xf32, #tpu.memory_space<vmem>>, %arg2: memref<32x64xbf16, #tpu.memory_space<vmem>>, %arg3: memref<1x64xf32, #tpu.memory_space<vmem>>, %arg4: memref<64x16xbf16, #tpu.memory_space<vmem>>, %arg5: memref<1x16xf32, #tpu.memory_space<vmem>>, %arg6: memref<16x16xf32, #tpu.memory_space<vmem>>) attributes {dimension_semantics = [#tpu.dimension_semantics<parallel>], iteration_bounds = array<i64: 1>, scalar_prefetch = 0 : i64, scratch_operands = 0 : i64, tpu.core_type = #tpu.core_type<tc>, window_params = [{pipeline_mode = #tpu.pipeline_mode<double_buffered>, transform_indices = @transform_0, window_bounds = array<i64: 16, 32>}, {pipeline_mode = #tpu.pipeline_mode<synchronous>, transform_indices = @transform_1, window_bounds = array<i64: 32, 64>}, {pipeline_mode = #tpu.pipeline_mode<synchronous>, transform_indices = @transform_2, window_bounds = array<i64: 1, 64>}, {pipeline_mode = #tpu.pipeline_mode<synchronous>, transform_indices = @transform_3, window_bounds = array<i64: 64, 16>}, {pipeline_mode = #tpu.pipeline_mode<synchronous>, transform_indices = @transform_4, window_bounds = array<i64: 1, 16>}, {transform_indices = @transform_5, window_bounds = array<i64: 16, 16>}]} {
    %c0 = arith.constant 0 : index
    %c0_0 = arith.constant 0 : index
    %0 = vector.load %arg1[%c0, %c0_0] : memref<16x32xf32, #tpu.memory_space<vmem>>, vector<16x32xf32>
    %1 = arith.truncf %0 : vector<16x32xf32> to vector<16x32xbf16>
    %c0_1 = arith.constant 0 : index
    %c0_2 = arith.constant 0 : index
    %2 = vector.load %arg2[%c0_1, %c0_2] : memref<32x64xbf16, #tpu.memory_space<vmem>>, vector<32x64xbf16>
    %cst = arith.constant dense<0.000000e+00> : vector<16x64xf32>
    %3 = tpu.matmul %1, %2, %cst {dimension_numbers = #tpu.dot_dimension_numbers<[1], [0], [0], [1], [0, 0, 1, 1], [], []>} : vector<16x32xbf16>, vector<32x64xbf16>, vector<16x64xf32> -> vector<16x64xf32>
    %c0_3 = arith.constant 0 : index
    %c0_4 = arith.constant 0 : index
    %4 = vector.load %arg3[%c0_3, %c0_4] : memref<1x64xf32, #tpu.memory_space<vmem>>, vector<1x64xf32>
    %5 = vector.broadcast %4 : vector<1x64xf32> to vector<16x64xf32>
    %6 = arith.addf %3, %5 : vector<16x64xf32>
    %cst_5 = arith.constant 0.000000e+00 : f32
    %7 = vector.broadcast %cst_5 : f32 to vector<16x64xf32>
    %8 = arith.maximumf %6, %7 : vector<16x64xf32>
    %9 = arith.truncf %8 : vector<16x64xf32> to vector<16x64xbf16>
    %c0_6 = arith.constant 0 : index
    %c0_7 = arith.constant 0 : index
    %10 = vector.load %arg4[%c0_6, %c0_7] : memref<64x16xbf16, #tpu.memory_space<vmem>>, vector<64x16xbf16>
    %cst_8 = arith.constant dense<0.000000e+00> : vector<16x16xf32>
    %11 = tpu.matmul %9, %10, %cst_8 {dimension_numbers = #tpu.dot_dimension_numbers<[1], [0], [0], [1], [0, 0, 1, 1], [], []>} : vector<16x64xbf16>, vector<64x16xbf16>, vector<16x16xf32> -> vector<16x16xf32>
    %c0_9 = arith.constant 0 : index
    %c0_10 = arith.constant 0 : index
    %12 = vector.load %arg5[%c0_9, %c0_10] : memref<1x16xf32, #tpu.memory_space<vmem>>, vector<1x16xf32>
    %13 = vector.broadcast %12 : vector<1x16xf32> to vector<16x16xf32>
    %14 = arith.addf %11, %13 : vector<16x16xf32>
    %c0_11 = arith.constant 0 : index
    %c0_12 = arith.constant 0 : index
    %15 = vector.load %arg6[%c0_11, %c0_12] : memref<16x16xf32, #tpu.memory_space<vmem>>, vector<16x16xf32>
    tpu.vector_store %arg6[%c0_11, %c0_12], %14 {strides = array<i32>} : memref<16x16xf32, #tpu.memory_space<vmem>>, vector<16x16xf32>,
    return
  }
  func.func @transform_0(%arg0: i32) -> (i32, i32) {
    %c0_i32 = arith.constant 0 : i32
    %c0_i32_0 = arith.constant 0 : i32
    return %arg0, %c0_i32 : i32, i32
  }
  func.func @transform_1(%arg0: i32) -> (i32, i32) {
    %c0_i32 = arith.constant 0 : i32
    %c0_i32_0 = arith.constant 0 : i32
    %c0_i32_1 = arith.constant 0 : i32
    return %c0_i32, %c0_i32_0 : i32, i32
  }
  func.func @transform_2(%arg0: i32) -> (i32, i32) {
    %c0_i32 = arith.constant 0 : i32
    %c0_i32_0 = arith.constant 0 : i32
    %c0_i32_1 = arith.constant 0 : i32
    return %c0_i32, %c0_i32_0 : i32, i32
  }
  func.func @transform_3(%arg0: i32) -> (i32, i32) {
    %c0_i32 = arith.constant 0 : i32
    %c0_i32_0 = arith.constant 0 : i32
    %c0_i32_1 = arith.constant 0 : i32
    return %c0_i32, %c0_i32_0 : i32, i32
  }
  func.func @transform_4(%arg0: i32) -> (i32, i32) {
    %c0_i32 = arith.constant 0 : i32
    %c0_i32_0 = arith.constant 0 : i32
    %c0_i32_1 = arith.constant 0 : i32
    return %c0_i32, %c0_i32_0 : i32, i32
  }
  func.func @transform_5(%arg0: i32) -> (i32, i32) {
    %c0_i32 = arith.constant 0 : i32
    %c0_i32_0 = arith.constant 0 : i32
    return %arg0, %c0_i32 : i32, i32
  }
}

</mosaic_0001>

<llo_original>
// kernel: sequential_forward.1
$region0: #{sequential_forward.1}
  #allocation0 [shape = 'u32[]', space=smem, size = 0x4, offset = 0x4, fixed_abs, tag = 'smem constant byte address 0x4 - core index']
  #allocation1 [shape = 'u32[144,128]{1,0:T(1,128)}', space=vmem, size = 0x12000, scoped, tag = 'internal scratch']
  %s0 = inlined_call_operand.vmem [shape: f32[16,32], index: 0, kind: input, shape index: {}]
  %s1 = inlined_call_operand.vmem [shape: bf16[32,64], index: 1, kind: input, shape index: {}]
  %s2 = inlined_call_operand.vmem [shape: f32[1,64], index: 2, kind: input, shape index: {}]
  %s3 = inlined_call_operand.vmem [shape: bf16[64,16], index: 3, kind: input, shape index: {}]
  %s4 = inlined_call_operand.vmem [shape: f32[1,16], index: 4, kind: input, shape index: {}]
  %s5 = inlined_call_operand.vmem [shape: f32[16,16], index: 5, kind: output, shape index: {}]
  %s6 = sld [smem:[#allocation0]]
  $region30: #{sequential_forward.1} parent=0
    _
  %s8 = ssub.s32 1, %s6
  %s9 = scalar_select 0, %s8, %s6
  // Predicated region
  $region2: #{sequential_forward.1} parent=0 // pred_check
    _
  $region3: #{sequential_forward.1} parent=0 // pred_check_branch
    %11 = sbr.rel (0) target = $region5
  $region4: #{sequential_forward.1} parent=0 // pred_region
    _
  $region5: #{sequential_forward.1} parent=0 // pred_fallthru
    _
  // Predicated region
  $region6: #{sequential_forward.1} parent=0 // pred_check
    _
  $region7: #{sequential_forward.1} parent=0 // pred_check_branch
    %13 = sbr.rel (0) target = $region9
  $region8: #{sequential_forward.1} parent=0 // pred_region
    _
  $region9: #{sequential_forward.1} parent=0 // pred_fallthru
    _
  // Predicated region
  $region10: #{sequential_forward.1} parent=0 // pred_check
    _
  $region11: #{sequential_forward.1} parent=0 // pred_check_branch
    %15 = sbr.rel (0) target = $region13
  $region12: #{sequential_forward.1} parent=0 // pred_region
    _
  $region13: #{sequential_forward.1} parent=0 // pred_fallthru
    _
  // Predicated region
  $region14: #{sequential_forward.1} parent=0 // pred_check
    _
  $region15: #{sequential_forward.1} parent=0 // pred_check_branch
    %17 = sbr.rel (0) target = $region17
  $region16: #{sequential_forward.1} parent=0 // pred_region
    _
  $region17: #{sequential_forward.1} parent=0 // pred_fallthru
    _
  // Predicated region
  $region18: #{sequential_forward.1} parent=0 // pred_check
    _
  $region19: #{sequential_forward.1} parent=0 // pred_check_branch
    %19 = sbr.rel (0) target = $region21
  $region20: #{sequential_forward.1} parent=0 // pred_region
    _
  $region21: #{sequential_forward.1} parent=0 // pred_fallthru
    _
  %v21 = vld [vmem:[%s0] sm:$0xff]
  %v22 = vld [vmem:[%s0 + $0x8] sm:$0xff]
  %v23 = vpack.c.bf16 %v22, %v21
  %v24 = vld [vmem:[%s1] sm:$0xf]
  %v25 = vld [vmem:[%s1 + $0x4] sm:$0xf]
  %v26 = vld [vmem:[%s1 + $0x8] sm:$0xf]
  %v27 = vld [vmem:[%s1 + $0xc] sm:$0xf]
  %v28 = vld [vmem:[%s2] sm:$0x1]
  %v30 = vlaneseq
  %v31 = vshrl.u32 %v30, 7
  %v32 = vsub.s32 0, %v31
  %v33 = vrot.slane %v28, %v32
  %v39 = vunpack.c.l.b16 %v24
  %v40 = vunpack.c.l.b16 %v25
  %v41 = vunpack.c.l.b16 %v26
  %v42 = vunpack.c.l.b16 %v27
  %v43 = vpack.c.b16 %v40, %v39
  %v44 = vpack.c.b16 %v42, %v41
  %vm47 = vcmask 261120
  %v49 = vsel %vm47, %v23, 0
  %51 = vmatprep.subr.bf16.mxu0 0
  %52 = vmatpush1.bf16.msra.mxu0 %v43
  %53 = vmatprep.subr.bf16.mxu0 0
  %54 = vmatpush1.bf16.msra.mxu0 %v44
  %55 = vmatprep.subr.bf16.mxu0 0
  %56 = vmatpush1.bf16.msra.mxu0 0
  %57 = vmatprep.subr.bf16.mxu0 0
  %58 = vmatpush1.bf16.msra.mxu0 0
  %59 = vmatprep.subr.bf16.mxu0 0
  %60 = vmatpush1.bf16.msra.mxu0 0
  %61 = vmatprep.subr.bf16.mxu0 0
  %62 = vmatpush1.bf16.msra.mxu0 0
  %63 = vmatprep.subr.bf16.mxu0 0
  %64 = vmatpush1.bf16.msra.mxu0 0
  %65 = vmatprep.subr.bf16.mxu0 0
  %66 = vmatpush1.bf16.msra.mxu0 0
  %67 = vmatprep.subr.bf16.mxu0 0
  %68 = vmatpush1.bf16.msra.mxu0 0
  %69 = vmatprep.subr.bf16.mxu0 0
  %70 = vmatpush1.bf16.msra.mxu0 0
  %71 = vmatprep.subr.bf16.mxu0 0
  %72 = vmatpush1.bf16.msra.mxu0 0
  %73 = vmatprep.subr.bf16.mxu0 0
  %74 = vmatpush1.bf16.msra.mxu0 0
  %75 = vmatprep.subr.bf16.mxu0 0
  %76 = vmatpush1.bf16.msra.mxu0 0
  %77 = vmatprep.subr.bf16.mxu0 0
  %78 = vmatpush1.bf16.msra.mxu0 0
  %79 = vmatprep.subr.bf16.mxu0 0
  %80 = vmatpush1.bf16.msra.mxu0 0
  %81 = vmatprep.subr.bf16.mxu0 0
  %82 = vmatpush1.bf16.msra.mxu0 0
  %83 = vmatprep.mubr.bf16.mxu0 0
  %84 = vmatmul.mubr.bf16.gmra.mrb[0].mxu0 %v49
  %v85 = vpop.f32.mrb[0].mxu0
  %v86 = vadd.f32 %v33, %v85
  %v87 = vpop.f32.mrb[0].mxu0
  %v88 = vpop.f32.mrb[0].mxu0
  %v89 = vadd.f32 %v33, %v88
  %v90 = vpop.f32.mrb[0].mxu0
  %91 = vdwg.mxu0
  %v92 = vmax.f32 %v86, 0.0
  %v93 = vmax.f32 %v89, 0.0
  %v94 = vpack.c.bf16 %v93, %v92
  %v95 = vld [vmem:[%s3] sm:$0xf]
  %v96 = vld [vmem:[%s3 + $0x4] sm:$0xf]
  %v97 = vld [vmem:[%s3 + $0x8] sm:$0xf]
  %v98 = vld [vmem:[%s3 + $0xc] sm:$0xf]
  %v99 = vld [vmem:[%s3 + $0x10] sm:$0xf]
  %v100 = vld [vmem:[%s3 + $0x14] sm:$0xf]
  %v101 = vld [vmem:[%s3 + $0x18] sm:$0xf]
  %v102 = vld [vmem:[%s3 + $0x1c] sm:$0xf]
  %v103 = vld [vmem:[%s4] sm:$0x1]
  %v105 = vlaneseq
  %v106 = vshrl.u32 %v105, 7
  %v107 = vsub.s32 0, %v106
  %v108 = vrot.slane %v103, %v107
  %v118 = vunpack.c.l.b16 %v95
  %v119 = vunpack.c.l.b16 %v96
  %v120 = vunpack.c.l.b16 %v97
  %v121 = vunpack.c.l.b16 %v98
  %v122 = vunpack.c.l.b16 %v99
  %v123 = vunpack.c.l.b16 %v100
  %v124 = vunpack.c.l.b16 %v101
  %v125 = vunpack.c.l.b16 %v102
  %v126 = vpack.c.b16 %v119, %v118
  %v127 = vpack.c.b16 %v121, %v120
  %v128 = vpack.c.b16 %v123, %v122
  %v129 = vpack.c.b16 %v125, %v124
  %vm134 = vcmask 523264
  %v136 = vsel %vm134, %v94, 0
  %138 = vmatprep.subr.bf16.mxu0 0
  %139 = vmatpush1.bf16.msra.mxu0 %v126
  %140 = vmatprep.subr.bf16.mxu0 0
  %141 = vmatpush1.bf16.msra.mxu0 %v127
  %142 = vmatprep.subr.bf16.mxu0 0
  %143 = vmatpush1.bf16.msra.mxu0 %v128
  %144 = vmatprep.subr.bf16.mxu0 0
  %145 = vmatpush1.bf16.msra.mxu0 %v129
  %146 = vmatprep.subr.bf16.mxu0 0
  %147 = vmatpush1.bf16.msra.mxu0 0
  %148 = vmatprep.subr.bf16.mxu0 0
  %149 = vmatpush1.bf16.msra.mxu0 0
  %150 = vmatprep.subr.bf16.mxu0 0
  %151 = vmatpush1.bf16.msra.mxu0 0
  %152 = vmatprep.subr.bf16.mxu0 0
  %153 = vmatpush1.bf16.msra.mxu0 0
  %154 = vmatprep.subr.bf16.mxu0 0
  %155 = vmatpush1.bf16.msra.mxu0 0
  %156 = vmatprep.subr.bf16.mxu0 0
  %157 = vmatpush1.bf16.msra.mxu0 0
  %158 = vmatprep.subr.bf16.mxu0 0
  %159 = vmatpush1.bf16.msra.mxu0 0
  %160 = vmatprep.subr.bf16.mxu0 0
  %161 = vmatpush1.bf16.msra.mxu0 0
  %162 = vmatprep.subr.bf16.mxu0 0
  %163 = vmatpush1.bf16.msra.mxu0 0
  %164 = vmatprep.subr.bf16.mxu0 0
  %165 = vmatpush1.bf16.msra.mxu0 0
  %166 = vmatprep.subr.bf16.mxu0 0
  %167 = vmatpush1.bf16.msra.mxu0 0
  %168 = vmatprep.subr.bf16.mxu0 0
  %169 = vmatpush1.bf16.msra.mxu0 0
  %170 = vmatprep.mubr.bf16.mxu0 0
  %171 = vmatmul.mubr.bf16.gmra.mrb[0].mxu0 %v136
  %v172 = vpop.f32.mrb[0].mxu0
  %v173 = vadd.f32 %v108, %v172
  %v174 = vpop.f32.mrb[0].mxu0
  %v175 = vpop.f32.mrb[0].mxu0
  %v176 = vadd.f32 %v108, %v175
  %v177 = vpop.f32.mrb[0].mxu0
  %178 = vdwg.mxu0
  %vm179 = vcmask 130048
  %180 = vst.msk [vmem:[%s5] sm:$0xff] %vm179, %v173
  %181 = vst.msk [vmem:[%s5 + $0x8] sm:$0xff] %vm179, %v176
  // Predicated region
  $region22: #{sequential_forward.1} parent=0 // pred_check
    _
  $region23: #{sequential_forward.1} parent=0 // pred_check_branch
    %183 = sbr.rel (0) target = $region25
  $region24: #{sequential_forward.1} parent=0 // pred_region
    _
  $region25: #{sequential_forward.1} parent=0 // pred_fallthru
    _
  // Predicated region
  $region26: #{sequential_forward.1} parent=0 // pred_check
    _
  $region27: #{sequential_forward.1} parent=0 // pred_check_branch
    %185 = sbr.rel (0) target = $region29
  $region28: #{sequential_forward.1} parent=0 // pred_region
    _
  $region29: #{sequential_forward.1} parent=0 // pred_fallthru
    _

</llo_original>
